<compile_context>
chip_gen: v6e
topology: v6e:2x2x1
jax: 0.10.0
libtpu: 0.0.40
codegen_flags: <defaults>
</compile_context>

<pallas_src>
import jax
import jax.numpy as jnp
from jax.experimental import pallas as pl
from jax.experimental.pallas import tpu as pltpu


_LANE = 128


def _round_up(x, m):
    return (x + m - 1) // m * m


def _glu_kernel(x_ref, w_ref, b_ref, o_ref, acc_a, acc_g):
    """One (tm, tn) GLU output tile, accumulated over the K (=D) grid axis.

    x_ref : (tm, tk)    input rows
    w_ref : (2, tk, tn) weight block; [0] = linear half, [1] = gate half,
                        both already in (in, out) layout -> plain MXU dots.
    b_ref : (2, tn)     row 0 = linear-bias slice, row 1 = gate-bias slice
    o_ref : (tm, tn)    output tile
    acc_* : (tm, tn)    f32 accumulators, resident across the K axis
    """
    k = pl.program_id(2)

    @pl.when(k == 0)
    def _():
        acc_a[...] = jnp.zeros_like(acc_a)
        acc_g[...] = jnp.zeros_like(acc_g)

    x = x_ref[...]
    acc_a[...] += jnp.dot(x, w_ref[0], preferred_element_type=jnp.float32)
    acc_g[...] += jnp.dot(x, w_ref[1], preferred_element_type=jnp.float32)

    @pl.when(k == pl.num_programs(2) - 1)
    def _():
        a = acc_a[...] + b_ref[0:1, :].astype(jnp.float32)
        g = acc_g[...] + b_ref[1:2, :].astype(jnp.float32)
        o_ref[...] = (a * jax.nn.sigmoid(g)).astype(o_ref.dtype)


def prepare_glu_params(weight, bias):
    """One-time (init-time) transform of nn.Linear(D, 2D) parameters.

    weight: (2D, D) PyTorch layout  ->  (2, Dp, Dp) [half, in, out], zero-padded
    bias  : (2D,)                   ->  (2, Dp)     [half, out],     zero-padded
    Doing the transpose here (once, outside the kernel) keeps any vxpose out
    of the matmul hot loop.
    """
    two_d, d = weight.shape
    assert two_d == 2 * d, weight.shape
    assert bias.shape == (two_d,), bias.shape
    dp = _round_up(d, _LANE)
    w = jnp.swapaxes(weight.reshape(2, d, d), 1, 2)        # (2, in, out)
    b = bias.reshape(2, d)
    if dp != d:
        w = jnp.pad(w, ((0, 0), (0, dp - d), (0, dp - d)))
        b = jnp.pad(b, ((0, 0), (0, dp - d)))
    return w, b


def _choose_tiles(m, dp, in_itemsize):
    """Pick (tm, tn, tk, padded_m). dp is already a multiple of 128."""
    # Row-tile cap: 2048 for 16-bit inputs, 1024 for f32 -- large enough to
    # clear the v6e/v7x HBM ridge, small enough (~16-18 MiB of VMEM including
    # double buffers + f32 accumulators) to fit v7x's 64 MiB VMEM per TC.
    cap = 2048 if in_itemsize <= 2 else 1024

    if m >= cap:
        tm, t = None, cap
        while t >= 256:
            if m % t == 0:
                tm = t
                break
            t //= 2
        if tm is None:                      # no nice divisor: pad up to cap
            tm = cap
        mp = _round_up(m, tm)
    else:
        tm = _round_up(m, 16)               # single row tile, bf16-sublane aligned
        mp = tm

    tn = tk = 128
    for c in (512, 256, 128):
        if dp % c == 0:
            tn = tk = c
            break

    # Keep >= 2 parallel (i, j) work items so v7x megacore uses both TCs.
    if (mp // tm) * (dp // tn) < 2 and tn > 128 and dp // (tn // 2) >= 2:
        tn //= 2
    return tm, tn, tk, mp


def glu_forward(x, w_prep, b_prep, *, interpret=False):
    """GLU: y = (x @ W^T + b)[..., :D] * sigmoid((x @ W^T + b)[..., D:]).

    x      : (B, S, D)
    w_prep : (2, Dp, Dp) from prepare_glu_params (half, in, out layout)
    b_prep : (2, Dp)
    For best performance pass x and w_prep in bf16 (accumulation is always f32).
    """
    B, S, D = x.shape
    dp = w_prep.shape[-1]
    assert w_prep.shape == (2, dp, dp) and dp >= D, (w_prep.shape, D)
    assert b_prep.shape == (2, dp), b_prep.shape
    M = B * S

    tm, tn, tk, mp = _choose_tiles(M, dp, x.dtype.itemsize)

    x2 = x.reshape(M, D)                    # flatten (B, S) -> rows (layout no-op)
    if (mp, dp) != (M, D):
        x2 = jnp.pad(x2, ((0, mp - M), (0, dp - D)))

    grid = (mp // tm, dp // tn, dp // tk)

    in_bs = x2.dtype.itemsize
    w_bs = w_prep.dtype.itemsize
    b_bs = b_prep.dtype.itemsize
    out_bs = x.dtype.itemsize

    # VMEM: double-buffered x / weight / bias / output tiles + 2 f32 accumulators.
    vmem_needed = (2 * (tm * tk * in_bs + 2 * tk * tn * w_bs
                        + tm * tn * out_bs + 2 * tn * b_bs)
                   + 2 * tm * tn * 4)
    vmem_limit = int(min(max(vmem_needed + (8 << 20), 32 << 20), 64 << 20))

    # Actual streamed HBM bytes: x re-read per output-column tile, weight/bias
    # re-read per output-row tile, plus one pass over the output.
    cost = pl.CostEstimate(
        flops=int(2 * mp * (2 * dp) * dp),
        transcendentals=int(mp * dp),                      # sigmoid on gate half
        bytes_accessed=int(x2.size * in_bs * (dp // tn)
                           + w_prep.size * w_bs * (mp // tm)
                           + b_prep.size * b_bs * (mp // tm)
                           + mp * dp * out_bs),
    )

    out = pl.pallas_call(
        _glu_kernel,
        out_shape=jax.ShapeDtypeStruct((mp, dp), x.dtype),
        grid_spec=pltpu.PrefetchScalarGridSpec(
            num_scalar_prefetch=0,
            grid=grid,
            in_specs=[
                pl.BlockSpec((tm, tk), lambda i, j, k: (i, k)),        # x rows
                pl.BlockSpec((2, tk, tn), lambda i, j, k: (0, k, j)),  # both W halves
                pl.BlockSpec((2, tn), lambda i, j, k: (0, j)),         # both bias halves
            ],
            out_specs=pl.BlockSpec((tm, tn), lambda i, j, k: (i, j)),
            scratch_shapes=[
                pltpu.VMEM((tm, tn), jnp.float32),   # linear-half accumulator
                pltpu.VMEM((tm, tn), jnp.float32),   # gate-half accumulator
            ],
        ),
        compiler_params=pltpu.CompilerParams(
            dimension_semantics=("parallel", "parallel", "arbitrary"),
            vmem_limit_bytes=vmem_limit),
        cost_estimate=cost,
        interpret=interpret,
    )(x2, w_prep, b_prep)

    return out[:M, :D].reshape(B, S, D)


def init_glu_params(key, input_dim, dtype=jnp.float32):
    """Deterministic init matching nn.Linear(input_dim, 2*input_dim) shapes."""
    k_w, k_b = jax.random.split(key)
    bound = 1.0 / (input_dim ** 0.5)        # PyTorch default uniform bound
    weight = jax.random.uniform(
        k_w, (2 * input_dim, input_dim), dtype, minval=-bound, maxval=bound)
    bias = jax.random.uniform(
        k_b, (2 * input_dim,), dtype, minval=-bound, maxval=bound)
    return weight, bias


if __name__ == "__main__":
    key = jax.random.PRNGKey(0)
    k_x, k_p = jax.random.split(key)

    B, S, D = 2, 64, 128
    x = jax.random.normal(k_x, (B, S, D), dtype=jnp.float32)
    weight, bias = init_glu_params(k_p, D)

    def ref_glu(xr, wr, br):
        out = jnp.einsum("bsd,ed->bse", xr.astype(jnp.float32),
                         wr.astype(jnp.float32),
                         preferred_element_type=jnp.float32)
        out = out + br.astype(jnp.float32)
        return out[..., :D] * jax.nn.sigmoid(out[..., D:])

    # One-time weight/bias prep (init-time in a real model, never in the hot loop).
    w_prep, b_prep = prepare_glu_params(weight, bias)

    # 1) f32 path: exact module semantics.
    y32 = glu_forward(x, w_prep, b_prep)
    jax.block_until_ready(y32)
    ref32 = ref_glu(x, weight, bias)
    assert y32.shape == (B, S, D)
    assert jnp.allclose(y32, ref32, atol=1e-3, rtol=1e-3), "f32 GLU mismatch"

    # 2) bf16 storage / bf16-MXU path (recommended production path), f32 accum.
    xb = x.astype(jnp.bfloat16)
    wb_prep = w_prep.astype(jnp.bfloat16)
    yb = glu_forward(xb, wb_prep, b_prep)
    jax.block_until_ready(yb)
    refb = ref_glu(xb, weight.astype(jnp.bfloat16), bias)
    assert yb.dtype == jnp.bfloat16
    assert jnp.allclose(yb.astype(jnp.float32), refb, atol=2e-2, rtol=2e-2), \
        "bf16 GLU mismatch"

    print("KERNEL_OK")
</pallas_src>

<mosaic_0001>
module attributes {stable_mosaic.version = 11 : i64} {
  func.func @_glu_kernel(%arg0: i32, %arg1: i32, %arg2: i32, %arg3: memref<128x128xf32, #tpu.memory_space<vmem>>, %arg4: memref<2x128x128xf32, #tpu.memory_space<vmem>>, %arg5: memref<2x128xf32, #tpu.memory_space<vmem>>, %arg6: memref<128x128xf32, #tpu.memory_space<vmem>>, %arg7: memref<128x128xf32, #tpu.memory_space<vmem>>, %arg8: memref<128x128xf32, #tpu.memory_space<vmem>>) attributes {dimension_semantics = [#tpu.dimension_semantics<parallel>, #tpu.dimension_semantics<parallel>, #tpu.dimension_semantics<arbitrary>], iteration_bounds = array<i64: 1, 1, 1>, scalar_prefetch = 0 : i64, scratch_operands = 2 : i64, tpu.core_type = #tpu.core_type<tc>, window_params = [{transform_indices = @transform_0, window_bounds = array<i64: 128, 128>}, {transform_indices = @transform_1, window_bounds = array<i64: 2, 128, 128>}, {transform_indices = @transform_2, window_bounds = array<i64: 2, 128>}, {transform_indices = @transform_3, window_bounds = array<i64: 128, 128>}]} {
    %c0_i32 = arith.constant 0 : i32
    %0 = arith.cmpi eq, %arg2, %c0_i32 : i32
    %1 = arith.extui %0 : i1 to i32
    %c0_i32_0 = arith.constant 0 : i32
    %2 = arith.cmpi ne, %1, %c0_i32_0 : i32
    scf.if %2 {
      %cst_18 = arith.constant 0.000000e+00 : f32
      %19 = vector.broadcast %cst_18 : f32 to vector<128x128xf32>
      %c0_19 = arith.constant 0 : index
      %c0_20 = arith.constant 0 : index
      %20 = vector.load %arg7[%c0_19, %c0_20] : memref<128x128xf32, #tpu.memory_space<vmem>>, vector<128x128xf32>
      tpu.vector_store %arg7[%c0_19, %c0_20], %19 {strides = array<i32>} : memref<128x128xf32, #tpu.memory_space<vmem>>, vector<128x128xf32>,
      %cst_21 = arith.constant 0.000000e+00 : f32
      %21 = vector.broadcast %cst_21 : f32 to vector<128x128xf32>
      %c0_22 = arith.constant 0 : index
      %c0_23 = arith.constant 0 : index
      %22 = vector.load %arg8[%c0_22, %c0_23] : memref<128x128xf32, #tpu.memory_space<vmem>>, vector<128x128xf32>
      tpu.vector_store %arg8[%c0_22, %c0_23], %21 {strides = array<i32>} : memref<128x128xf32, #tpu.memory_space<vmem>>, vector<128x128xf32>,
    } else {
    }
    %c0 = arith.constant 0 : index
    %c0_1 = arith.constant 0 : index
    %3 = vector.load %arg3[%c0, %c0_1] : memref<128x128xf32, #tpu.memory_space<vmem>>, vector<128x128xf32>
    %c0_2 = arith.constant 0 : index
    %c0_3 = arith.constant 0 : index
    %4 = vector.load %arg7[%c0_2, %c0_3] : memref<128x128xf32, #tpu.memory_space<vmem>>, vector<128x128xf32>
    %c0_4 = arith.constant 0 : index
    %c0_5 = arith.constant 0 : index
    %c0_6 = arith.constant 0 : index
    %5 = vector.load %arg4[%c0_4, %c0_5, %c0_6] : memref<2x128x128xf32, #tpu.memory_space<vmem>>, vector<1x128x128xf32>
    %6 = vector.shape_cast %5 : vector<1x128x128xf32> to vector<128x128xf32>
    %cst = arith.constant dense<0.000000e+00> : vector<128x128xf32>
    %7 = tpu.matmul %3, %6, %cst {dimension_numbers = #tpu.dot_dimension_numbers<[1], [0], [0], [1], [0, 0, 1, 1], [], []>} : vector<128x128xf32>, vector<128x128xf32>, vector<128x128xf32> -> vector<128x128xf32>
    %8 = arith.addf %4, %7 : vector<128x128xf32>
    %c0_7 = arith.constant 0 : index
    %c0_8 = arith.constant 0 : index
    %9 = vector.load %arg7[%c0_7, %c0_8] : memref<128x128xf32, #tpu.memory_space<vmem>>, vector<128x128xf32>
    tpu.vector_store %arg7[%c0_7, %c0_8], %8 {strides = array<i32>} : memref<128x128xf32, #tpu.memory_space<vmem>>, vector<128x128xf32>,
    %c0_9 = arith.constant 0 : index
    %c0_10 = arith.constant 0 : index
    %10 = vector.load %arg8[%c0_9, %c0_10] : memref<128x128xf32, #tpu.memory_space<vmem>>, vector<128x128xf32>
    %c1 = arith.constant 1 : index
    %c0_11 = arith.constant 0 : index
    %c0_12 = arith.constant 0 : index
    %11 = vector.load %arg4[%c1, %c0_11, %c0_12] : memref<2x128x128xf32, #tpu.memory_space<vmem>>, vector<1x128x128xf32>
    %12 = vector.shape_cast %11 : vector<1x128x128xf32> to vector<128x128xf32>
    %cst_13 = arith.constant dense<0.000000e+00> : vector<128x128xf32>
    %13 = tpu.matmul %3, %12, %cst_13 {dimension_numbers = #tpu.dot_dimension_numbers<[1], [0], [0], [1], [0, 0, 1, 1], [], []>} : vector<128x128xf32>, vector<128x128xf32>, vector<128x128xf32> -> vector<128x128xf32>
    %14 = arith.addf %10, %13 : vector<128x128xf32>
    %c0_14 = arith.constant 0 : index
    %c0_15 = arith.constant 0 : index
    %15 = vector.load %arg8[%c0_14, %c0_15] : memref<128x128xf32, #tpu.memory_space<vmem>>, vector<128x128xf32>
    tpu.vector_store %arg8[%c0_14, %c0_15], %14 {strides = array<i32>} : memref<128x128xf32, #tpu.memory_space<vmem>>, vector<128x128xf32>,
    %c0_i32_16 = arith.constant 0 : i32
    %16 = arith.cmpi eq, %arg2, %c0_i32_16 : i32
    %17 = arith.extui %16 : i1 to i32
    %c0_i32_17 = arith.constant 0 : i32
    %18 = arith.cmpi ne, %17, %c0_i32_17 : i32
    scf.if %18 {
      %c0_18 = arith.constant 0 : index
      %c0_19 = arith.constant 0 : index
      %19 = vector.load %arg7[%c0_18, %c0_19] : memref<128x128xf32, #tpu.memory_space<vmem>>, vector<128x128xf32>
      %c0_20 = arith.constant 0 : index
      %c0_21 = arith.constant 0 : index
      %20 = vector.load %arg5[%c0_20, %c0_21] : memref<2x128xf32, #tpu.memory_space<vmem>>, vector<1x128xf32>
      %21 = vector.broadcast %20 : vector<1x128xf32> to vector<128x128xf32>
      %22 = arith.addf %19, %21 : vector<128x128xf32>
      %c0_22 = arith.constant 0 : index
      %c0_23 = arith.constant 0 : index
      %23 = vector.load %arg8[%c0_22, %c0_23] : memref<128x128xf32, #tpu.memory_space<vmem>>, vector<128x128xf32>
      %c1_24 = arith.constant 1 : index
      %c0_25 = arith.constant 0 : index
      %24 = vector.load %arg5[%c1_24, %c0_25] : memref<2x128xf32, #tpu.memory_space<vmem>>, vector<1x128xf32>
      %25 = vector.broadcast %24 : vector<1x128xf32> to vector<128x128xf32>
      %26 = arith.addf %23, %25 : vector<128x128xf32>
      %27 = arith.negf %26 : vector<128x128xf32>
      %28 = math.exp %27 : vector<128x128xf32>
      %cst_26 = arith.constant 1.000000e+00 : f32
      %29 = vector.broadcast %cst_26 : f32 to vector<128x128xf32>
      %30 = arith.addf %29, %28 : vector<128x128xf32>
      %31 = arith.divf %29, %30 : vector<128x128xf32>
      %32 = arith.mulf %22, %31 : vector<128x128xf32>
      %c0_27 = arith.constant 0 : index
      %c0_28 = arith.constant 0 : index
      %33 = vector.load %arg6[%c0_27, %c0_28] : memref<128x128xf32, #tpu.memory_space<vmem>>, vector<128x128xf32>
      tpu.vector_store %arg6[%c0_27, %c0_28], %32 {strides = array<i32>} : memref<128x128xf32, #tpu.memory_space<vmem>>, vector<128x128xf32>,
    } else {
    }
    return
  }
  func.func @transform_0(%arg0: i32, %arg1: i32, %arg2: i32) -> (i32, i32) {
    %c0_i32 = arith.constant 0 : i32
    return %arg0, %arg2 : i32, i32
  }
  func.func @transform_1(%arg0: i32, %arg1: i32, %arg2: i32) -> (i32, i32, i32) {
    %c0_i32 = arith.constant 0 : i32
    %c0_i32_0 = arith.constant 0 : i32
    return %c0_i32, %arg2, %arg1 : i32, i32, i32
  }
  func.func @transform_2(%arg0: i32, %arg1: i32, %arg2: i32) -> (i32, i32) {
    %c0_i32 = arith.constant 0 : i32
    %c0_i32_0 = arith.constant 0 : i32
    return %c0_i32, %arg1 : i32, i32
  }
  func.func @transform_3(%arg0: i32, %arg1: i32, %arg2: i32) -> (i32, i32) {
    %c0_i32 = arith.constant 0 : i32
    return %arg0, %arg1 : i32, i32
  }
}

</mosaic_0001>

<llo_original>
// kernel: tpu_custom_call.1
$region0: #{tpu_custom_call.1}
  #allocation0 [shape = 'u32[]', space=smem, size = 0x4, offset = 0x4, fixed_abs, tag = 'smem constant byte address 0x4 - core index']
  #allocation1 [shape = 'u32[144,128]{1,0:T(1,128)}', space=vmem, size = 0x12000, scoped, tag = 'internal scratch']
  #allocation2 [shape = 'f32[128,128]{1,0:T(8,128)}', space=vmem, size = 0x10000, scoped, tag = 'scratch operand']
  #allocation3 [shape = 'f32[128,128]{1,0:T(8,128)}', space=vmem, size = 0x10000, scoped, tag = 'scratch operand']
  %s0 = inlined_call_operand.hbm [shape: f32[128,128], index: 0, kind: input, shape index: {}]
  %s1 = inlined_call_operand.hbm [shape: f32[2,128,128], index: 1, kind: input, shape index: {}]
  %s2 = inlined_call_operand.vmem [shape: f32[2,128], index: 2, kind: input, shape index: {}]
  %s3 = inlined_call_operand.hbm [shape: f32[128,128], index: 3, kind: output, shape index: {}]
  %s4 = sld [smem:[#allocation0]]
  $region38: #{tpu_custom_call.1} parent=0
    _
  %s6 = ssub.s32 1, %s4
  %s7 = scalar_select 0, %s6, %s4
  $region1: #{tpu_custom_call.1} parent=0
    #allocation4 [shape = 'u8[65536]{0}', space=vmem, size = 0x10000, scoped, tag = 'input window, operand 0, single buffered']
    #allocation5 [shape = 's32[1]{0}', space=sflag, size = 0x4, scoped, tag = 'scoped memory for tpu_custom_call.1']
    #allocation6 [shape = 's32[1]{0}', space=sflag, size = 0x4, scoped, tag = 'scoped memory for tpu_custom_call.1']
    #allocation7 [shape = 'u8[131072]{0}', space=vmem, size = 0x20000, scoped, tag = 'input window, operand 1, single buffered']
    #allocation8 [shape = 's32[1]{0}', space=sflag, size = 0x4, scoped, tag = 'scoped memory for tpu_custom_call.1']
    #allocation9 [shape = 'u8[65536]{0}', space=vmem, size = 0x10000, scoped, tag = 'output window, operand 0, single buffered']
    %8 = vsyncpa [#allocation5], 0
    %9 = vsyncpa [#allocation8], 0
    %10 = vsyncpa [#allocation6], 0
    // Predicated region
    $region2: #{tpu_custom_call.1} parent=1 // pred_check
      _
    $region3: #{tpu_custom_call.1} parent=1 // pred_check_branch
      %12 = sbr.rel (0) target = $region5
    $region4: #{tpu_custom_call.1} parent=1 // pred_region
      %s14 = ssub.s32 2048, 2048
      %15 = vsyncadd [#allocation5], %s14
      %s16 = sshll.u32 [#allocation4], 4
      %s17 = int_to_ptr.vmem [resolvable:$true] %s16
      %22 = dma.hbm_to_vmem [thread:$0]  %s0, 2048, %s17, [#allocation5], 128, 128, 8
    $region5: #{tpu_custom_call.1} parent=1 // pred_fallthru
      _
    // Predicated region
    $region6: #{tpu_custom_call.1} parent=1 // pred_check
      _
    $region7: #{tpu_custom_call.1} parent=1 // pred_check_branch
      %24 = sbr.rel (0) target = $region9
    $region8: #{tpu_custom_call.1} parent=1 // pred_region
      %s26 = ssub.s32 4096, 4096
      %27 = vsyncadd [#allocation8], %s26
      %s28 = sshll.u32 [#allocation7], 4
      %s29 = int_to_ptr.vmem [resolvable:$true] %s28
      %34 = dma.hbm_to_vmem [thread:$0]  %s1, 4096, %s29, [#allocation8], 128, 128, 8
    $region9: #{tpu_custom_call.1} parent=1 // pred_fallthru
      _
    // Predicated region
    $region10: #{tpu_custom_call.1} parent=1 // pred_check
      _
    $region11: #{tpu_custom_call.1} parent=1 // pred_check_branch
      %36 = sbr.rel (0) target = $region13
    $region12: #{tpu_custom_call.1} parent=1 // pred_region
      _
    $region13: #{tpu_custom_call.1} parent=1 // pred_fallthru
      _
    // Predicated region
    $region14: #{tpu_custom_call.1} parent=1 // pred_check
      _
    $region15: #{tpu_custom_call.1} parent=1 // pred_check_branch
      %38 = sbr.rel (0) target = $region17
    $region16: #{tpu_custom_call.1} parent=1 // pred_region
      %39 = dma.done [#allocation5], 2048
    $region17: #{tpu_custom_call.1} parent=1 // pred_fallthru
      _
    // Predicated region
    $region18: #{tpu_custom_call.1} parent=1 // pred_check
      _
    $region19: #{tpu_custom_call.1} parent=1 // pred_check_branch
      %41 = sbr.rel (0) target = $region21
    $region20: #{tpu_custom_call.1} parent=1 // pred_region
      %42 = dma.done [#allocation8], 4096
    $region21: #{tpu_custom_call.1} parent=1 // pred_fallthru
      _
    %p43 = scmp.eq.s32.totalorder 0, 0
    // Predicated region
    $region22: #{tpu_custom_call.1} parent=1 // pred_check
      %p44 = pneg %p43
    $region23: #{tpu_custom_call.1} parent=1 // pred_check_branch
      %46 = sbr.rel (%p44) target = $region25
    $region24: #{tpu_custom_call.1} parent=1 // pred_region
      %47 = vst [vmem:[#allocation2] sm:$0xff] 0.0
      %48 = vst [vmem:[#allocation2 + $0x8] sm:$0xff] 0.0
      %49 = vst [vmem:[#allocation2 + $0x10] sm:$0xff] 0.0
      %50 = vst [vmem:[#allocation2 + $0x18] sm:$0xff] 0.0
      %51 = vst [vmem:[#allocation2 + $0x20] sm:$0xff] 0.0
      %52 = vst [vmem:[#allocation2 + $0x28] sm:$0xff] 0.0
      %53 = vst [vmem:[#allocation2 + $0x30] sm:$0xff] 0.0
      %54 = vst [vmem:[#allocation2 + $0x38] sm:$0xff] 0.0
      %55 = vst [vmem:[#allocation2 + $0x40] sm:$0xff] 0.0
      %56 = vst [vmem:[#allocation2 + $0x48] sm:$0xff] 0.0
      %57 = vst [vmem:[#allocation2 + $0x50] sm:$0xff] 0.0
      %58 = vst [vmem:[#allocation2 + $0x58] sm:$0xff] 0.0
      %59 = vst [vmem:[#allocation2 + $0x60] sm:$0xff] 0.0
      %60 = vst [vmem:[#allocation2 + $0x68] sm:$0xff] 0.0
      %61 = vst [vmem:[#allocation2 + $0x70] sm:$0xff] 0.0
      %62 = vst [vmem:[#allocation2 + $0x78] sm:$0xff] 0.0
      %63 = vst [vmem:[#allocation3] sm:$0xff] 0.0
      %64 = vst [vmem:[#allocation3 + $0x8] sm:$0xff] 0.0
      %65 = vst [vmem:[#allocation3 + $0x10] sm:$0xff] 0.0
      %66 = vst [vmem:[#allocation3 + $0x18] sm:$0xff] 0.0
      %67 = vst [vmem:[#allocation3 + $0x20] sm:$0xff] 0.0
      %68 = vst [vmem:[#allocation3 + $0x28] sm:$0xff] 0.0
      %69 = vst [vmem:[#allocation3 + $0x30] sm:$0xff] 0.0
      %70 = vst [vmem:[#allocation3 + $0x38] sm:$0xff] 0.0
      %71 = vst [vmem:[#allocation3 + $0x40] sm:$0xff] 0.0
      %72 = vst [vmem:[#allocation3 + $0x48] sm:$0xff] 0.0
      %73 = vst [vmem:[#allocation3 + $0x50] sm:$0xff] 0.0
      %74 = vst [vmem:[#allocation3 + $0x58] sm:$0xff] 0.0
      %75 = vst [vmem:[#allocation3 + $0x60] sm:$0xff] 0.0
      %76 = vst [vmem:[#allocation3 + $0x68] sm:$0xff] 0.0
      %77 = vst [vmem:[#allocation3 + $0x70] sm:$0xff] 0.0
      %78 = vst [vmem:[#allocation3 + $0x78] sm:$0xff] 0.0
    $region25: #{tpu_custom_call.1} parent=1 // pred_fallthru
      _
    %v79 = vld [vmem:[#allocation4] sm:$0xff]
    %v80 = vld [vmem:[#allocation4 + $0x8] sm:$0xff]
    %v81 = vld [vmem:[#allocation4 + $0x10] sm:$0xff]
    %v82 = vld [vmem:[#allocation4 + $0x18] sm:$0xff]
    %v83 = vld [vmem:[#allocation4 + $0x20] sm:$0xff]
    %v84 = vld [vmem:[#allocation4 + $0x28] sm:$0xff]
    %v85 = vld [vmem:[#allocation4 + $0x30] sm:$0xff]
    %v86 = vld [vmem:[#allocation4 + $0x38] sm:$0xff]
    %v87 = vld [vmem:[#allocation4 + $0x40] sm:$0xff]
    %v88 = vld [vmem:[#allocation4 + $0x48] sm:$0xff]
    %v89 = vld [vmem:[#allocation4 + $0x50] sm:$0xff]
    %v90 = vld [vmem:[#allocation4 + $0x58] sm:$0xff]
    %v91 = vld [vmem:[#allocation4 + $0x60] sm:$0xff]
    %v92 = vld [vmem:[#allocation4 + $0x68] sm:$0xff]
    %v93 = vld [vmem:[#allocation4 + $0x70] sm:$0xff]
    %v94 = vld [vmem:[#allocation4 + $0x78] sm:$0xff]
    %v95 = vld [vmem:[#allocation2] sm:$0xff]
    %v96 = vld [vmem:[#allocation2 + $0x8] sm:$0xff]
    %v97 = vld [vmem:[#allocation2 + $0x10] sm:$0xff]
    %v98 = vld [vmem:[#allocation2 + $0x18] sm:$0xff]
    %v99 = vld [vmem:[#allocation2 + $0x20] sm:$0xff]
    %v100 = vld [vmem:[#allocation2 + $0x28] sm:$0xff]
    %v101 = vld [vmem:[#allocation2 + $0x30] sm:$0xff]
    %v102 = vld [vmem:[#allocation2 + $0x38] sm:$0xff]
    %v103 = vld [vmem:[#allocation2 + $0x40] sm:$0xff]
    %v104 = vld [vmem:[#allocation2 + $0x48] sm:$0xff]
    %v105 = vld [vmem:[#allocation2 + $0x50] sm:$0xff]
    %v106 = vld [vmem:[#allocation2 + $0x58] sm:$0xff]
    %v107 = vld [vmem:[#allocation2 + $0x60] sm:$0xff]
    %v108 = vld [vmem:[#allocation2 + $0x68] sm:$0xff]
    %v109 = vld [vmem:[#allocation2 + $0x70] sm:$0xff]
    %v110 = vld [vmem:[#allocation2 + $0x78] sm:$0xff]
    %v111 = vld [vmem:[#allocation7] sm:$0xff]
    %v112 = vld [vmem:[#allocation7 + $0x8] sm:$0xff]
    %v113 = vld [vmem:[#allocation7 + $0x10] sm:$0xff]
    %v114 = vld [vmem:[#allocation7 + $0x18] sm:$0xff]
    %v115 = vld [vmem:[#allocation7 + $0x20] sm:$0xff]
    %v116 = vld [vmem:[#allocation7 + $0x28] sm:$0xff]
    %v117 = vld [vmem:[#allocation7 + $0x30] sm:$0xff]
    %v118 = vld [vmem:[#allocation7 + $0x38] sm:$0xff]
    %v119 = vld [vmem:[#allocation7 + $0x40] sm:$0xff]
    %v120 = vld [vmem:[#allocation7 + $0x48] sm:$0xff]
    %v121 = vld [vmem:[#allocation7 + $0x50] sm:$0xff]
    %v122 = vld [vmem:[#allocation7 + $0x58] sm:$0xff]
    %v123 = vld [vmem:[#allocation7 + $0x60] sm:$0xff]
    %v124 = vld [vmem:[#allocation7 + $0x68] sm:$0xff]
    %v125 = vld [vmem:[#allocation7 + $0x70] sm:$0xff]
    %v126 = vld [vmem:[#allocation7 + $0x78] sm:$0xff]
    %127 = vmatprep.subr.mxu0 0.0
    %128 = vmatpush1.msra.mxu0 %v126
    %129 = vmatprep.subr.mxu0 0.0
    %130 = vmatpush1.msra.mxu0 %v125
    %131 = vmatprep.subr.mxu0 0.0
    %132 = vmatpush1.msra.mxu0 %v124
    %133 = vmatprep.subr.mxu0 0.0
    %134 = vmatpush1.msra.mxu0 %v123
    %135 = vmatprep.subr.mxu0 0.0
    %136 = vmatpush1.msra.mxu0 %v122
    %137 = vmatprep.subr.mxu0 0.0
    %138 = vmatpush1.msra.mxu0 %v121
    %139 = vmatprep.subr.mxu0 0.0
    %140 = vmatpush1.msra.mxu0 %v120
    %141 = vmatprep.subr.mxu0 0.0
    %142 = vmatpush1.msra.mxu0 %v119
    %143 = vmatprep.subr.mxu0 0.0
    %144 = vmatpush1.msra.mxu0 %v118
    %145 = vmatprep.subr.mxu0 0.0
    %146 = vmatpush1.msra.mxu0 %v117
    %147 = vmatprep.subr.mxu0 0.0
    %148 = vmatpush1.msra.mxu0 %v116
    %149 = vmatprep.subr.mxu0 0.0
    %150 = vmatpush1.msra.mxu0 %v115
    %151 = vmatprep.subr.mxu0 0.0
    %152 = vmatpush1.msra.mxu0 %v114
    %153 = vmatprep.subr.mxu0 0.0
    %154 = vmatpush1.msra.mxu0 %v113
    %155 = vmatprep.subr.mxu0 0.0
    %156 = vmatpush1.msra.mxu0 %v112
    %157 = vmatprep.subr.mxu0 0.0
    %158 = vmatpush1.msra.mxu0 %v111
    %159 = vmatprep.subr.mxu0 0.0
    %160 = vmatpush2.msra.mxu0 0.0
    %161 = vmatprep.subr.mxu0 0.0
    %162 = vmatpush2.msra.mxu0 0.0
    %163 = vmatprep.subr.mxu0 0.0
    %164 = vmatpush2.msra.mxu0 0.0
    %165 = vmatprep.subr.mxu0 0.0
    %166 = vmatpush2.msra.mxu0 0.0
    %167 = vmatprep.subr.mxu0 0.0
    %168 = vmatpush2.msra.mxu0 0.0
    %169 = vmatprep.subr.mxu0 0.0
    %170 = vmatpush2.msra.mxu0 0.0
    %171 = vmatprep.subr.mxu0 0.0
    %172 = vmatpush2.msra.mxu0 0.0
    %173 = vmatprep.subr.mxu0 0.0
    %174 = vmatpush2.msra.mxu0 0.0
    %175 = vmatprep.subr.mxu0 0.0
    %176 = vmatpush2.msra.mxu0 0.0
    %177 = vmatprep.subr.mxu0 0.0
    %178 = vmatpush2.msra.mxu0 0.0
    %179 = vmatprep.subr.mxu0 0.0
    %180 = vmatpush2.msra.mxu0 0.0
    %181 = vmatprep.subr.mxu0 0.0
    %182 = vmatpush2.msra.mxu0 0.0
    %183 = vmatprep.subr.mxu0 0.0
    %184 = vmatpush2.msra.mxu0 0.0
    %185 = vmatprep.subr.mxu0 0.0
    %186 = vmatpush2.msra.mxu0 0.0
    %187 = vmatprep.subr.mxu0 0.0
    %188 = vmatpush2.msra.mxu0 0.0
    %189 = vmatprep.subr.mxu0 0.0
    %190 = vmatpush2.msra.mxu0 0.0
    %191 = vmatprep.mubr.f32.mxu0 0.0
    %192 = vmatmul.mubr.f32.gmra.mxu0 %v79
    %v193 = vpop.f32.mrf.mxu0
    %v194 = vadd.f32 0.0, %v193
    %v195 = vpop.f32.mrf.mxu0
    %196 = vmatprep.mubr.f32.mxu0 0.0
    %197 = vmatmul.mubr.f32.gmra.mxu0 %v80
    %v198 = vpop.f32.mrf.mxu0
    %v199 = vadd.f32 0.0, %v198
    %v200 = vpop.f32.mrf.mxu0
    %201 = vmatprep.mubr.f32.mxu0 0.0
    %202 = vmatmul.mubr.f32.gmra.mxu0 %v81
    %v203 = vpop.f32.mrf.mxu0
    %v204 = vadd.f32 0.0, %v203
    %v205 = vpop.f32.mrf.mxu0
    %206 = vmatprep.mubr.f32.mxu0 0.0
    %207 = vmatmul.mubr.f32.gmra.mxu0 %v82
    %v208 = vpop.f32.mrf.mxu0
    %v209 = vadd.f32 0.0, %v208
    %v210 = vpop.f32.mrf.mxu0
    %211 = vmatprep.mubr.f32.mxu0 0.0
    %212 = vmatmul.mubr.f32.gmra.mxu0 %v83
    %v213 = vpop.f32.mrf.mxu0
    %v214 = vadd.f32 0.0, %v213
    %v215 = vpop.f32.mrf.mxu0
    %216 = vmatprep.mubr.f32.mxu0 0.0
    %217 = vmatmul.mubr.f32.gmra.mxu0 %v84
    %v218 = vpop.f32.mrf.mxu0
    %v219 = vadd.f32 0.0, %v218
    %v220 = vpop.f32.mrf.mxu0
    %221 = vmatprep.mubr.f32.mxu0 0.0
    %222 = vmatmul.mubr.f32.gmra.mxu0 %v85
    %v223 = vpop.f32.mrf.mxu0
    %v224 = vadd.f32 0.0, %v223
    %v225 = vpop.f32.mrf.mxu0
    %226 = vmatprep.mubr.f32.mxu0 0.0
    %227 = vmatmul.mubr.f32.gmra.mxu0 %v86
    %v228 = vpop.f32.mrf.mxu0
    %v229 = vadd.f32 0.0, %v228
    %v230 = vpop.f32.mrf.mxu0
    %231 = vmatprep.mubr.f32.mxu0 0.0
    %232 = vmatmul.mubr.f32.gmra.mxu0 %v87
    %v233 = vpop.f32.mrf.mxu0
    %v234 = vadd.f32 0.0, %v233
    %v235 = vpop.f32.mrf.mxu0
    %236 = vmatprep.mubr.f32.mxu0 0.0
    %237 = vmatmul.mubr.f32.gmra.mxu0 %v88
    %v238 = vpop.f32.mrf.mxu0
    %v239 = vadd.f32 0.0, %v238
    %v240 = vpop.f32.mrf.mxu0
    %241 = vmatprep.mubr.f32.mxu0 0.0
    %242 = vmatmul.mubr.f32.gmra.mxu0 %v89
    %v243 = vpop.f32.mrf.mxu0
    %v244 = vadd.f32 0.0, %v243
    %v245 = vpop.f32.mrf.mxu0
    %246 = vmatprep.mubr.f32.mxu0 0.0
    %247 = vmatmul.mubr.f32.gmra.mxu0 %v90
    %v248 = vpop.f32.mrf.mxu0
    %v249 = vadd.f32 0.0, %v248
    %v250 = vpop.f32.mrf.mxu0
    %251 = vmatprep.mubr.f32.mxu0 0.0
    %252 = vmatmul.mubr.f32.gmra.mxu0 %v91
    %v253 = vpop.f32.mrf.mxu0
    %v254 = vadd.f32 0.0, %v253
    %v255 = vpop.f32.mrf.mxu0
    %256 = vmatprep.mubr.f32.mxu0 0.0
    %257 = vmatmul.mubr.f32.gmra.mxu0 %v92
    %v258 = vpop.f32.mrf.mxu0
    %v259 = vadd.f32 0.0, %v258
    %v260 = vpop.f32.mrf.mxu0
    %261 = vmatprep.mubr.f32.mxu0 0.0
    %262 = vmatmul.mubr.f32.gmra.mxu0 %v93
    %v263 = vpop.f32.mrf.mxu0
    %v264 = vadd.f32 0.0, %v263
    %v265 = vpop.f32.mrf.mxu0
    %266 = vmatprep.mubr.f32.mxu0 0.0
    %267 = vmatmul.mubr.f32.gmra.mxu0 %v94
    %v268 = vpop.f32.mrf.mxu0
    %v269 = vadd.f32 0.0, %v268
    %v270 = vpop.f32.mrf.mxu0
    %271 = vdwg.mxu0
    %v272 = vadd.f32 %v95, %v194
    %v273 = vadd.f32 %v96, %v199
    %v274 = vadd.f32 %v97, %v204
    %v275 = vadd.f32 %v98, %v209
    %v276 = vadd.f32 %v99, %v214
    %v277 = vadd.f32 %v100, %v219
    %v278 = vadd.f32 %v101, %v224
    %v279 = vadd.f32 %v102, %v229
    %v280 = vadd.f32 %v103, %v234
    %v281 = vadd.f32 %v104, %v239
    %v282 = vadd.f32 %v105, %v244
    %v283 = vadd.f32 %v106, %v249
    %v284 = vadd.f32 %v107, %v254
    %v285 = vadd.f32 %v108, %v259
    %v286 = vadd.f32 %v109, %v264
    %v287 = vadd.f32 %v110, %v269
    %288 = vst [vmem:[#allocation2] sm:$0xff] %v272
    %289 = vst [vmem:[#allocation2 + $0x8] sm:$0xff] %v273
    %290 = vst [vmem:[#allocation2 + $0x10] sm:$0xff] %v274
    %291 = vst [vmem:[#allocation2 + $0x18] sm:$0xff] %v275
    %292 = vst [vmem:[#allocation2 + $0x20] sm:$0xff] %v276
    %293 = vst [vmem:[#allocation2 + $0x28] sm:$0xff] %v277
    %294 = vst [vmem:[#allocation2 + $0x30] sm:$0xff] %v278
    %295 = vst [vmem:[#allocation2 + $0x38] sm:$0xff] %v279
    %296 = vst [vmem:[#allocation2 + $0x40] sm:$0xff] %v280
    %297 = vst [vmem:[#allocation2 + $0x48] sm:$0xff] %v281
    %298 = vst [vmem:[#allocation2 + $0x50] sm:$0xff] %v282
    %299 = vst [vmem:[#allocation2 + $0x58] sm:$0xff] %v283
    %300 = vst [vmem:[#allocation2 + $0x60] sm:$0xff] %v284
    %301 = vst [vmem:[#allocation2 + $0x68] sm:$0xff] %v285
    %302 = vst [vmem:[#allocation2 + $0x70] sm:$0xff] %v286
    %303 = vst [vmem:[#allocation2 + $0x78] sm:$0xff] %v287
    %v304 = vld [vmem:[#allocation3] sm:$0xff]
    %v305 = vld [vmem:[#allocation3 + $0x8] sm:$0xff]
    %v306 = vld [vmem:[#allocation3 + $0x10] sm:$0xff]
    %v307 = vld [vmem:[#allocation3 + $0x18] sm:$0xff]
    %v308 = vld [vmem:[#allocation3 + $0x20] sm:$0xff]
    %v309 = vld [vmem:[#allocation3 + $0x28] sm:$0xff]
    %v310 = vld [vmem:[#allocation3 + $0x30] sm:$0xff]
    %v311 = vld [vmem:[#allocation3 + $0x38] sm:$0xff]
    %v312 = vld [vmem:[#allocation3 + $0x40] sm:$0xff]
    %v313 = vld [vmem:[#allocation3 + $0x48] sm:$0xff]
    %v314 = vld [vmem:[#allocation3 + $0x50] sm:$0xff]
    %v315 = vld [vmem:[#allocation3 + $0x58] sm:$0xff]
    %v316 = vld [vmem:[#allocation3 + $0x60] sm:$0xff]
    %v317 = vld [vmem:[#allocation3 + $0x68] sm:$0xff]
    %v318 = vld [vmem:[#allocation3 + $0x70] sm:$0xff]
    %v319 = vld [vmem:[#allocation3 + $0x78] sm:$0xff]
    %s320 = scalar_lea.vmem [#allocation7], 128
    %v321 = vld [vmem:[%s320] sm:$0xff]
    %v322 = vld [vmem:[%s320 + $0x8] sm:$0xff]
    %v323 = vld [vmem:[%s320 + $0x10] sm:$0xff]
    %v324 = vld [vmem:[%s320 + $0x18] sm:$0xff]
    %v325 = vld [vmem:[%s320 + $0x20] sm:$0xff]
    %v326 = vld [vmem:[%s320 + $0x28] sm:$0xff]
    %v327 = vld [vmem:[%s320 + $0x30] sm:$0xff]
    %v328 = vld [vmem:[%s320 + $0x38] sm:$0xff]
    %v329 = vld [vmem:[%s320 + $0x40] sm:$0xff]
    %v330 = vld [vmem:[%s320 + $0x48] sm:$0xff]
    %v331 = vld [vmem:[%s320 + $0x50] sm:$0xff]
    %v332 = vld [vmem:[%s320 + $0x58] sm:$0xff]
    %v333 = vld [vmem:[%s320 + $0x60] sm:$0xff]
    %v334 = vld [vmem:[%s320 + $0x68] sm:$0xff]
    %v335 = vld [vmem:[%s320 + $0x70] sm:$0xff]
    %v336 = vld [vmem:[%s320 + $0x78] sm:$0xff]
    %337 = vmatprep.subr.mxu0 0.0
    %338 = vmatpush1.msra.mxu0 %v336
    %339 = vmatprep.subr.mxu0 0.0
    %340 = vmatpush1.msra.mxu0 %v335
    %341 = vmatprep.subr.mxu0 0.0
    %342 = vmatpush1.msra.mxu0 %v334
    %343 = vmatprep.subr.mxu0 0.0
    %344 = vmatpush1.msra.mxu0 %v333
    %345 = vmatprep.subr.mxu0 0.0
    %346 = vmatpush1.msra.mxu0 %v332
    %347 = vmatprep.subr.mxu0 0.0
    %348 = vmatpush1.msra.mxu0 %v331
    %349 = vmatprep.subr.mxu0 0.0
    %350 = vmatpush1.msra.mxu0 %v330
    %351 = vmatprep.subr.mxu0 0.0
    %352 = vmatpush1.msra.mxu0 %v329
    %353 = vmatprep.subr.mxu0 0.0
    %354 = vmatpush1.msra.mxu0 %v328
    %355 = vmatprep.subr.mxu0 0.0
    %356 = vmatpush1.msra.mxu0 %v327
    %357 = vmatprep.subr.mxu0 0.0
    %358 = vmatpush1.msra.mxu0 %v326
    %359 = vmatprep.subr.mxu0 0.0
    %360 = vmatpush1.msra.mxu0 %v325
    %361 = vmatprep.subr.mxu0 0.0
    %362 = vmatpush1.msra.mxu0 %v324
    %363 = vmatprep.subr.mxu0 0.0
    %364 = vmatpush1.msra.mxu0 %v323
    %365 = vmatprep.subr.mxu0 0.0
    %366 = vmatpush1.msra.mxu0 %v322
    %367 = vmatprep.subr.mxu0 0.0
    %368 = vmatpush1.msra.mxu0 %v321
    %369 = vmatprep.subr.mxu0 0.0
    %370 = vmatpush2.msra.mxu0 0.0
    %371 = vmatprep.subr.mxu0 0.0
    %372 = vmatpush2.msra.mxu0 0.0
    %373 = vmatprep.subr.mxu0 0.0
    %374 = vmatpush2.msra.mxu0 0.0
    %375 = vmatprep.subr.mxu0 0.0
    %376 = vmatpush2.msra.mxu0 0.0
    %377 = vmatprep.subr.mxu0 0.0
    %378 = vmatpush2.msra.mxu0 0.0
    %379 = vmatprep.subr.mxu0 0.0
    %380 = vmatpush2.msra.mxu0 0.0
    %381 = vmatprep.subr.mxu0 0.0
    %382 = vmatpush2.msra.mxu0 0.0
    %383 = vmatprep.subr.mxu0 0.0
    %384 = vmatpush2.msra.mxu0 0.0
    %385 = vmatprep.subr.mxu0 0.0
    %386 = vmatpush2.msra.mxu0 0.0
    %387 = vmatprep.subr.mxu0 0.0
    %388 = vmatpush2.msra.mxu0 0.0
    %389 = vmatprep.subr.mxu0 0.0
    %390 = vmatpush2.msra.mxu0 0.0
    %391 = vmatprep.subr.mxu0 0.0
    %392 = vmatpush2.msra.mxu0 0.0
    %393 = vmatprep.subr.mxu0 0.0
    %394 = vmatpush2.msra.mxu0 0.0
    %395 = vmatprep.subr.mxu0 0.0
    %396 = vmatpush2.msra.mxu0 0.0
    %397 = vmatprep.subr.mxu0 0.0
    %398 = vmatpush2.msra.mxu0 0.0
    %399 = vmatprep.subr.mxu0 0.0
    %400 = vmatpush2.msra.mxu0 0.0
    %401 = vmatprep.mubr.f32.mxu0 0.0
    %402 = vmatmul.mubr.f32.gmra.mxu0 %v79
    %v403 = vpop.f32.mrf.mxu0
    %v404 = vadd.f32 0.0, %v403
    %v405 = vpop.f32.mrf.mxu0
    %406 = vmatprep.mubr.f32.mxu0 0.0
    %407 = vmatmul.mubr.f32.gmra.mxu0 %v80
    %v408 = vpop.f32.mrf.mxu0
    %v409 = vadd.f32 0.0, %v408
    %v410 = vpop.f32.mrf.mxu0
    %411 = vmatprep.mubr.f32.mxu0 0.0
    %412 = vmatmul.mubr.f32.gmra.mxu0 %v81
    %v413 = vpop.f32.mrf.mxu0
    %v414 = vadd.f32 0.0, %v413
    %v415 = vpop.f32.mrf.mxu0
    %416 = vmatprep.mubr.f32.mxu0 0.0
    %417 = vmatmul.mubr.f32.gmra.mxu0 %v82
    %v418 = vpop.f32.mrf.mxu0
    %v419 = vadd.f32 0.0, %v418
    %v420 = vpop.f32.mrf.mxu0
    %421 = vmatprep.mubr.f32.mxu0 0.0
    %422 = vmatmul.mubr.f32.gmra.mxu0 %v83
    %v423 = vpop.f32.mrf.mxu0
    %v424 = vadd.f32 0.0, %v423
    %v425 = vpop.f32.mrf.mxu0
    %426 = vmatprep.mubr.f32.mxu0 0.0
    %427 = vmatmul.mubr.f32.gmra.mxu0 %v84
    %v428 = vpop.f32.mrf.mxu0
    %v429 = vadd.f32 0.0, %v428
    %v430 = vpop.f32.mrf.mxu0
    %431 = vmatprep.mubr.f32.mxu0 0.0
    %432 = vmatmul.mubr.f32.gmra.mxu0 %v85
    %v433 = vpop.f32.mrf.mxu0
    %v434 = vadd.f32 0.0, %v433
    %v435 = vpop.f32.mrf.mxu0
    %436 = vmatprep.mubr.f32.mxu0 0.0
    %437 = vmatmul.mubr.f32.gmra.mxu0 %v86
    %v438 = vpop.f32.mrf.mxu0
    %v439 = vadd.f32 0.0, %v438
    %v440 = vpop.f32.mrf.mxu0
    %441 = vmatprep.mubr.f32.mxu0 0.0
    %442 = vmatmul.mubr.f32.gmra.mxu0 %v87
    %v443 = vpop.f32.mrf.mxu0
    %v444 = vadd.f32 0.0, %v443
    %v445 = vpop.f32.mrf.mxu0
    %446 = vmatprep.mubr.f32.mxu0 0.0
    %447 = vmatmul.mubr.f32.gmra.mxu0 %v88
    %v448 = vpop.f32.mrf.mxu0
    %v449 = vadd.f32 0.0, %v448
    %v450 = vpop.f32.mrf.mxu0
    %451 = vmatprep.mubr.f32.mxu0 0.0
    %452 = vmatmul.mubr.f32.gmra.mxu0 %v89
    %v453 = vpop.f32.mrf.mxu0
    %v454 = vadd.f32 0.0, %v453
    %v455 = vpop.f32.mrf.mxu0
    %456 = vmatprep.mubr.f32.mxu0 0.0
    %457 = vmatmul.mubr.f32.gmra.mxu0 %v90
    %v458 = vpop.f32.mrf.mxu0
    %v459 = vadd.f32 0.0, %v458
    %v460 = vpop.f32.mrf.mxu0
    %461 = vmatprep.mubr.f32.mxu0 0.0
    %462 = vmatmul.mubr.f32.gmra.mxu0 %v91
    %v463 = vpop.f32.mrf.mxu0
    %v464 = vadd.f32 0.0, %v463
    %v465 = vpop.f32.mrf.mxu0
    %466 = vmatprep.mubr.f32.mxu0 0.0
    %467 = vmatmul.mubr.f32.gmra.mxu0 %v92
    %v468 = vpop.f32.mrf.mxu0
    %v469 = vadd.f32 0.0, %v468
    %v470 = vpop.f32.mrf.mxu0
    %471 = vmatprep.mubr.f32.mxu0 0.0
    %472 = vmatmul.mubr.f32.gmra.mxu0 %v93
    %v473 = vpop.f32.mrf.mxu0
    %v474 = vadd.f32 0.0, %v473
    %v475 = vpop.f32.mrf.mxu0
    %476 = vmatprep.mubr.f32.mxu0 0.0
    %477 = vmatmul.mubr.f32.gmra.mxu0 %v94
    %v478 = vpop.f32.mrf.mxu0
    %v479 = vadd.f32 0.0, %v478
    %v480 = vpop.f32.mrf.mxu0
    %481 = vdwg.mxu0
    %v482 = vadd.f32 %v304, %v404
    %v483 = vadd.f32 %v305, %v409
    %v484 = vadd.f32 %v306, %v414
    %v485 = vadd.f32 %v307, %v419
    %v486 = vadd.f32 %v308, %v424
    %v487 = vadd.f32 %v309, %v429
    %v488 = vadd.f32 %v310, %v434
    %v489 = vadd.f32 %v311, %v439
    %v490 = vadd.f32 %v312, %v444
    %v491 = vadd.f32 %v313, %v449
    %v492 = vadd.f32 %v314, %v454
    %v493 = vadd.f32 %v315, %v459
    %v494 = vadd.f32 %v316, %v464
    %v495 = vadd.f32 %v317, %v469
    %v496 = vadd.f32 %v318, %v474
    %v497 = vadd.f32 %v319, %v479
    %498 = vst [vmem:[#allocation3] sm:$0xff] %v482
    %499 = vst [vmem:[#allocation3 + $0x8] sm:$0xff] %v483
    %500 = vst [vmem:[#allocation3 + $0x10] sm:$0xff] %v484
    %501 = vst [vmem:[#allocation3 + $0x18] sm:$0xff] %v485
    %502 = vst [vmem:[#allocation3 + $0x20] sm:$0xff] %v486
    %503 = vst [vmem:[#allocation3 + $0x28] sm:$0xff] %v487
    %504 = vst [vmem:[#allocation3 + $0x30] sm:$0xff] %v488
    %505 = vst [vmem:[#allocation3 + $0x38] sm:$0xff] %v489
    %506 = vst [vmem:[#allocation3 + $0x40] sm:$0xff] %v490
    %507 = vst [vmem:[#allocation3 + $0x48] sm:$0xff] %v491
    %508 = vst [vmem:[#allocation3 + $0x50] sm:$0xff] %v492
    %509 = vst [vmem:[#allocation3 + $0x58] sm:$0xff] %v493
    %510 = vst [vmem:[#allocation3 + $0x60] sm:$0xff] %v494
    %511 = vst [vmem:[#allocation3 + $0x68] sm:$0xff] %v495
    %512 = vst [vmem:[#allocation3 + $0x70] sm:$0xff] %v496
    %513 = vst [vmem:[#allocation3 + $0x78] sm:$0xff] %v497
    // Predicated region
    $region26: #{tpu_custom_call.1} parent=1 // pred_check
      %p514 = pneg %p43
    $region27: #{tpu_custom_call.1} parent=1 // pred_check_branch
      %516 = sbr.rel (%p514) target = $region29
    $region28: #{tpu_custom_call.1} parent=1 // pred_region
      %v517 = vld [vmem:[#allocation2] sm:$0xff]
      %v518 = vld [vmem:[#allocation2 + $0x8] sm:$0xff]
      %v519 = vld [vmem:[#allocation2 + $0x10] sm:$0xff]
      %v520 = vld [vmem:[#allocation2 + $0x18] sm:$0xff]
      %v521 = vld [vmem:[#allocation2 + $0x20] sm:$0xff]
      %v522 = vld [vmem:[#allocation2 + $0x28] sm:$0xff]
      %v523 = vld [vmem:[#allocation2 + $0x30] sm:$0xff]
      %v524 = vld [vmem:[#allocation2 + $0x38] sm:$0xff]
      %v525 = vld [vmem:[#allocation2 + $0x40] sm:$0xff]
      %v526 = vld [vmem:[#allocation2 + $0x48] sm:$0xff]
      %v527 = vld [vmem:[#allocation2 + $0x50] sm:$0xff]
      %v528 = vld [vmem:[#allocation2 + $0x58] sm:$0xff]
      %v529 = vld [vmem:[#allocation2 + $0x60] sm:$0xff]
      %v530 = vld [vmem:[#allocation2 + $0x68] sm:$0xff]
      %v531 = vld [vmem:[#allocation2 + $0x70] sm:$0xff]
      %v532 = vld [vmem:[#allocation2 + $0x78] sm:$0xff]
      %v533 = vld [vmem:[%s2] sm:$0x1]
      %v534 = vlaneseq
      %v535 = vshrl.u32 %v534, 7
      %v536 = vsub.s32 0, %v535
      %v537 = vrot.slane %v533, %v536
      %v538 = vadd.f32 %v517, %v537
      %v539 = vadd.f32 %v518, %v537
      %v540 = vadd.f32 %v519, %v537
      %v541 = vadd.f32 %v520, %v537
      %v542 = vadd.f32 %v521, %v537
      %v543 = vadd.f32 %v522, %v537
      %v544 = vadd.f32 %v523, %v537
      %v545 = vadd.f32 %v524, %v537
      %v546 = vadd.f32 %v525, %v537
      %v547 = vadd.f32 %v526, %v537
      %v548 = vadd.f32 %v527, %v537
      %v549 = vadd.f32 %v528, %v537
      %v550 = vadd.f32 %v529, %v537
      %v551 = vadd.f32 %v530, %v537
      %v552 = vadd.f32 %v531, %v537
      %v553 = vadd.f32 %v532, %v537
      %v554 = vld [vmem:[#allocation3] sm:$0xff]
      %v555 = vld [vmem:[#allocation3 + $0x8] sm:$0xff]
      %v556 = vld [vmem:[#allocation3 + $0x10] sm:$0xff]
      %v557 = vld [vmem:[#allocation3 + $0x18] sm:$0xff]
      %v558 = vld [vmem:[#allocation3 + $0x20] sm:$0xff]
      %v559 = vld [vmem:[#allocation3 + $0x28] sm:$0xff]
      %v560 = vld [vmem:[#allocation3 + $0x30] sm:$0xff]
      %v561 = vld [vmem:[#allocation3 + $0x38] sm:$0xff]
      %v562 = vld [vmem:[#allocation3 + $0x40] sm:$0xff]
      %v563 = vld [vmem:[#allocation3 + $0x48] sm:$0xff]
      %v564 = vld [vmem:[#allocation3 + $0x50] sm:$0xff]
      %v565 = vld [vmem:[#allocation3 + $0x58] sm:$0xff]
      %v566 = vld [vmem:[#allocation3 + $0x60] sm:$0xff]
      %v567 = vld [vmem:[#allocation3 + $0x68] sm:$0xff]
      %v568 = vld [vmem:[#allocation3 + $0x70] sm:$0xff]
      %v569 = vld [vmem:[#allocation3 + $0x78] sm:$0xff]
      %v570 = vld [vmem:[%s2 + $0x1] sm:$0x1]
      %v571 = vlaneseq
      %v572 = vshrl.u32 %v571, 7
      %v573 = vsub.s32 0, %v572
      %v574 = vrot.slane %v570, %v573
      %v575 = vadd.f32 %v554, %v574
      %v576 = vadd.f32 %v555, %v574
      %v577 = vadd.f32 %v556, %v574
      %v578 = vadd.f32 %v557, %v574
      %v579 = vadd.f32 %v558, %v574
      %v580 = vadd.f32 %v559, %v574
      %v581 = vadd.f32 %v560, %v574
      %v582 = vadd.f32 %v561, %v574
      %v583 = vadd.f32 %v562, %v574
      %v584 = vadd.f32 %v563, %v574
      %v585 = vadd.f32 %v564, %v574
      %v586 = vadd.f32 %v565, %v574
      %v587 = vadd.f32 %v566, %v574
      %v588 = vadd.f32 %v567, %v574
      %v589 = vadd.f32 %v568, %v574
      %v590 = vadd.f32 %v569, %v574
      %v591 = vxor.u32 %v575, 2147483648
      %v592 = vxor.u32 %v576, 2147483648
      %v593 = vxor.u32 %v577, 2147483648
      %v594 = vxor.u32 %v578, 2147483648
      %v595 = vxor.u32 %v579, 2147483648
      %v596 = vxor.u32 %v580, 2147483648
      %v597 = vxor.u32 %v581, 2147483648
      %v598 = vxor.u32 %v582, 2147483648
      %v599 = vxor.u32 %v583, 2147483648
      %v600 = vxor.u32 %v584, 2147483648
      %v601 = vxor.u32 %v585, 2147483648
      %v602 = vxor.u32 %v586, 2147483648
      %v603 = vxor.u32 %v587, 2147483648
      %v604 = vxor.u32 %v588, 2147483648
      %v605 = vxor.u32 %v589, 2147483648
      %v606 = vxor.u32 %v590, 2147483648
      %v607 = vmul.f32 %v591, 1.442695
      %v608 = vpow.pop %v607
      %v609 = vmul.f32 %v592, 1.442695
      %v610 = vpow.pop %v609
      %v611 = vmul.f32 %v593, 1.442695
      %v612 = vpow.pop %v611
      %v613 = vmul.f32 %v594, 1.442695
      %v614 = vpow.pop %v613
      %v615 = vmul.f32 %v595, 1.442695
      %v616 = vpow.pop %v615
      %v617 = vmul.f32 %v596, 1.442695
      %v618 = vpow.pop %v617
      %v619 = vmul.f32 %v597, 1.442695
      %v620 = vpow.pop %v619
      %v621 = vmul.f32 %v598, 1.442695
      %v622 = vpow.pop %v621
      %v623 = vmul.f32 %v599, 1.442695
      %v624 = vpow.pop %v623
      %v625 = vmul.f32 %v600, 1.442695
      %v626 = vpow.pop %v625
      %v627 = vmul.f32 %v601, 1.442695
      %v628 = vpow.pop %v627
      %v629 = vmul.f32 %v602, 1.442695
      %v630 = vpow.pop %v629
      %v631 = vmul.f32 %v603, 1.442695
      %v632 = vpow.pop %v631
      %v633 = vmul.f32 %v604, 1.442695
      %v634 = vpow.pop %v633
      %v635 = vmul.f32 %v605, 1.442695
      %v636 = vpow.pop %v635
      %v637 = vmul.f32 %v606, 1.442695
      %v638 = vpow.pop %v637
      %v639 = vadd.f32 %v608, 1.0
      %v640 = vadd.f32 %v610, 1.0
      %v641 = vadd.f32 %v612, 1.0
      %v642 = vadd.f32 %v614, 1.0
      %v643 = vadd.f32 %v616, 1.0
      %v644 = vadd.f32 %v618, 1.0
      %v645 = vadd.f32 %v620, 1.0
      %v646 = vadd.f32 %v622, 1.0
      %v647 = vadd.f32 %v624, 1.0
      %v648 = vadd.f32 %v626, 1.0
      %v649 = vadd.f32 %v628, 1.0
      %v650 = vadd.f32 %v630, 1.0
      %v651 = vadd.f32 %v632, 1.0
      %v652 = vadd.f32 %v634, 1.0
      %v653 = vadd.f32 %v636, 1.0
      %v654 = vadd.f32 %v638, 1.0
      %v655 = vrcp.pop %v639
      %v656 = vmul.f32 1.0, %v655
      %v657 = vrcp.pop %v640
      %v658 = vmul.f32 1.0, %v657
      %v659 = vrcp.pop %v641
      %v660 = vmul.f32 1.0, %v659
      %v661 = vrcp.pop %v642
      %v662 = vmul.f32 1.0, %v661
      %v663 = vrcp.pop %v643
      %v664 = vmul.f32 1.0, %v663
      %v665 = vrcp.pop %v644
      %v666 = vmul.f32 1.0, %v665
      %v667 = vrcp.pop %v645
      %v668 = vmul.f32 1.0, %v667
      %v669 = vrcp.pop %v646
      %v670 = vmul.f32 1.0, %v669
      %v671 = vrcp.pop %v647
      %v672 = vmul.f32 1.0, %v671
      %v673 = vrcp.pop %v648
      %v674 = vmul.f32 1.0, %v673
      %v675 = vrcp.pop %v649
      %v676 = vmul.f32 1.0, %v675
      %v677 = vrcp.pop %v650
      %v678 = vmul.f32 1.0, %v677
      %v679 = vrcp.pop %v651
      %v680 = vmul.f32 1.0, %v679
      %v681 = vrcp.pop %v652
      %v682 = vmul.f32 1.0, %v681
      %v683 = vrcp.pop %v653
      %v684 = vmul.f32 1.0, %v683
      %v685 = vrcp.pop %v654
      %v686 = vmul.f32 1.0, %v685
      %v687 = vmul.f32 %v538, %v656
      %v688 = vmul.f32 %v539, %v658
      %v689 = vmul.f32 %v540, %v660
      %v690 = vmul.f32 %v541, %v662
      %v691 = vmul.f32 %v542, %v664
      %v692 = vmul.f32 %v543, %v666
      %v693 = vmul.f32 %v544, %v668
      %v694 = vmul.f32 %v545, %v670
      %v695 = vmul.f32 %v546, %v672
      %v696 = vmul.f32 %v547, %v674
      %v697 = vmul.f32 %v548, %v676
      %v698 = vmul.f32 %v549, %v678
      %v699 = vmul.f32 %v550, %v680
      %v700 = vmul.f32 %v551, %v682
      %v701 = vmul.f32 %v552, %v684
      %v702 = vmul.f32 %v553, %v686
      %703 = vst [vmem:[#allocation9] sm:$0xff] %v687
      %704 = vst [vmem:[#allocation9 + $0x8] sm:$0xff] %v688
      %705 = vst [vmem:[#allocation9 + $0x10] sm:$0xff] %v689
      %706 = vst [vmem:[#allocation9 + $0x18] sm:$0xff] %v690
      %707 = vst [vmem:[#allocation9 + $0x20] sm:$0xff] %v691
      %708 = vst [vmem:[#allocation9 + $0x28] sm:$0xff] %v692
      %709 = vst [vmem:[#allocation9 + $0x30] sm:$0xff] %v693
      %710 = vst [vmem:[#allocation9 + $0x38] sm:$0xff] %v694
      %711 = vst [vmem:[#allocation9 + $0x40] sm:$0xff] %v695
      %712 = vst [vmem:[#allocation9 + $0x48] sm:$0xff] %v696
      %713 = vst [vmem:[#allocation9 + $0x50] sm:$0xff] %v697
      %714 = vst [vmem:[#allocation9 + $0x58] sm:$0xff] %v698
      %715 = vst [vmem:[#allocation9 + $0x60] sm:$0xff] %v699
      %716 = vst [vmem:[#allocation9 + $0x68] sm:$0xff] %v700
      %717 = vst [vmem:[#allocation9 + $0x70] sm:$0xff] %v701
      %718 = vst [vmem:[#allocation9 + $0x78] sm:$0xff] %v702
    $region29: #{tpu_custom_call.1} parent=1 // pred_fallthru
      _
    // Predicated region
    $region30: #{tpu_custom_call.1} parent=1 // pred_check
      _
    $region31: #{tpu_custom_call.1} parent=1 // pred_check_branch
      %720 = sbr.rel (0) target = $region33
    $region32: #{tpu_custom_call.1} parent=1 // pred_region
      %s722 = ssub.s32 2048, 2048
      %723 = vsyncadd [#allocation6], %s722
      %s724 = sshll.u32 [#allocation9], 4
      %s725 = int_to_ptr.vmem [resolvable:$true] %s724
      %730 = dma.vmem_to_hbm [thread:$0]  %s725, 2048, %s3, [#allocation6], 128, 128, 8
    $region33: #{tpu_custom_call.1} parent=1 // pred_fallthru
      _
    // Predicated region
    $region34: #{tpu_custom_call.1} parent=1 // pred_check
      _
    $region35: #{tpu_custom_call.1} parent=1 // pred_check_branch
      %732 = sbr.rel (0) target = $region37
    $region36: #{tpu_custom_call.1} parent=1 // pred_region
      %733 = dma.done [#allocation6], 2048
    $region37: #{tpu_custom_call.1} parent=1 // pred_fallthru
      _
    %734 = vsyncpa [#allocation5], 1
    %735 = vsyncpa [#allocation8], 1
    %736 = vsyncpa [#allocation6], 1

</llo_original>
